<compile_context>
chip_gen: v7x
topology: tpu7x:2x2x1
jax: 0.10.0
libtpu: 0.0.40
codegen_flags: <defaults>
</compile_context>

<pallas_src>
import functools

import jax
import jax.numpy as jnp
from jax import lax
from jax.experimental import pallas as pl
from jax.experimental.pallas import tpu as pltpu


def _knn_loss_partial_kernel(logits_ref, knn_ref, tgt_ref, ce_out, knn_out,
                             *, n_total, tile_n):
    """Per-tile partial sums of the CE and kNN-NLL terms.

    Writes one lane/sublane-dense (8, 128) slab per output per tile so the
    grid axis can be 'parallel' (megacore-shardable on v7x); the tiny scalar
    epilogue (two sums + coeff math + /N) happens in the JAX wrapper.
    """
    pid = pl.program_id(0)
    tn, c = logits_ref.shape

    tgt = tgt_ref[...]                                           # (tn, 1) i32

    # Row-validity mask for the (possibly) ragged last tile.
    row_ids = lax.broadcasted_iota(jnp.int32, (tn, 1), 0) + pid * tile_n
    valid = row_ids < n_total                                    # (tn, 1) bool

    # (1, C) iota: the broadcast to (tn, C) happens inside the compare, so no
    # full-tile iota slab is materialized.
    col_ids = lax.broadcasted_iota(jnp.int32, (1, c), 1)
    mask = col_ids == tgt                                        # (tn, C) bool

    # --- Cross-entropy term: logsumexp(logits) - logits[target] -------------
    # f32 upcast kept only here (numerically needed for exp/log).
    logits = logits_ref[...].astype(jnp.float32)                 # (tn, C) f32
    m = jnp.max(logits, axis=-1, keepdims=True)                  # (tn, 1)
    lse = jnp.log(jnp.sum(jnp.exp(logits - m), axis=-1, keepdims=True)) + m
    tgt_logit = jnp.sum(jnp.where(mask, logits, 0.0), axis=-1, keepdims=True)
    ce_row = jnp.where(valid, lse - tgt_logit, 0.0)              # (tn, 1)
    ce_sum = jnp.sum(ce_row, axis=0, keepdims=True)              # (1, 1)

    # --- kNN NLL term (target only): -clamp(log(knn_t / sum(knn)), -100) ----
    # Consumed in native dtype with f32 accumulation: no full-(tn, C) upcast.
    knn = knn_ref[...]                                           # (tn, C) nat.
    denom = jnp.sum(knn, axis=-1, keepdims=True, dtype=jnp.float32)
    zero = jnp.zeros((), dtype=knn.dtype)
    knn_t = jnp.sum(jnp.where(mask, knn, zero), axis=-1, keepdims=True,
                    dtype=jnp.float32)
    tgt_logp = jnp.maximum(jnp.log(knn_t / denom), -100.0)       # (tn, 1)
    nll_row = jnp.where(valid, -tgt_logp, 0.0)                   # (tn, 1)
    knn_sum = jnp.sum(nll_row, axis=0, keepdims=True)            # (1, 1)

    # Lane-dense partial writes (unmasked stores); wrapper reads [i, 0, 0].
    ce_out[0] = jnp.broadcast_to(ce_sum, ce_out.shape[1:])
    knn_out[0] = jnp.broadcast_to(knn_sum, knn_out.shape[1:])


def _scoped_vmem_limit_bytes():
    """Generation-aware scoped-VMEM limit (~75% of physical, capped 100 MiB)."""
    phys = None
    try:
        phys = getattr(pltpu.get_tpu_info(), "vmem_capacity_bytes", None)
    except Exception:
        phys = None
    if not phys:
        phys = 64 << 20           # conservative fallback (v7x-sized)
    return min((int(phys) * 3) // 4, 100 << 20)


def knn_loss(pred_logits, knn_logits, targets, coeff, *, max_tile_rows=4096):
    """Pallas implementation of knnLoss.forward.

    pred_logits / knn_logits may be f32 or bf16; bf16 halves HBM traffic and
    is recommended on v5e/v6e where this kernel is read-bandwidth bound.
    """
    n, c = pred_logits.shape
    isz_p = jnp.dtype(pred_logits.dtype).itemsize
    isz_k = jnp.dtype(knn_logits.dtype).itemsize

    vmem_limit = _scoped_vmem_limit_bytes()

    # True per-row VMEM footprint of one tile:
    #   * pred / knn input slabs, double-buffered by the pipeline,
    #   * ~3 in-kernel f32 temporaries of (tile_n, C) (f32 logits, exp, select),
    #   * targets block lane-padded to 128 lanes, double-buffered.
    per_row = (2 * c * isz_p + 2 * c * isz_k) + 3 * c * 4 + 2 * 128 * 4
    budget = int(vmem_limit * 0.85)            # headroom for outputs/regs
    rows_cap = max(8, budget // per_row)
    rows_cap = min(rows_cap, max_tile_rows)
    if rows_cap >= n:
        tile_n = n                             # single block (full-dim exemption)
    else:
        tile_n = max(8, (rows_cap // 8) * 8)   # keep the sublane granule
    num_tiles = pl.cdiv(n, tile_n)

    tgt_2d = targets.astype(jnp.int32).reshape(n, 1)

    grid_spec = pltpu.PrefetchScalarGridSpec(
        num_scalar_prefetch=0,
        grid=(num_tiles,),
        in_specs=[
            pl.BlockSpec((tile_n, c), lambda i: (i, 0)),    # pred_logits
            pl.BlockSpec((tile_n, c), lambda i: (i, 0)),    # knn_logits
            pl.BlockSpec((tile_n, 1), lambda i: (i, 0)),    # targets
        ],
        out_specs=(
            pl.BlockSpec((1, 8, 128), lambda i: (i, 0, 0)),  # ce partials
            pl.BlockSpec((1, 8, 128), lambda i: (i, 0, 0)),  # knn partials
        ),
    )

    ce_part, knn_part = pl.pallas_call(
        functools.partial(_knn_loss_partial_kernel, n_total=n, tile_n=tile_n),
        grid_spec=grid_spec,
        out_shape=(jax.ShapeDtypeStruct((num_tiles, 8, 128), jnp.float32),
                   jax.ShapeDtypeStruct((num_tiles, 8, 128), jnp.float32)),
        compiler_params=pltpu.CompilerParams(
            dimension_semantics=("parallel",),
            vmem_limit_bytes=int(vmem_limit)),
    )(pred_logits, knn_logits, tgt_2d)

    # Tiny scalar epilogue in plain JAX (cheaper than a follow-up pallas_call).
    inv_n = 1.0 / float(n)
    ce_mean = jnp.sum(ce_part[:, 0, 0]) * inv_n
    knn_mean = jnp.sum(knn_part[:, 0, 0]) * inv_n
    coeff = jnp.asarray(coeff, jnp.float32)
    # loss = ce + ce * knn_loss * coeff ; final = loss / N
    return ce_mean * (1.0 + knn_mean * coeff) * inv_n


def _knn_loss_ref(pred_logits, knn_logits, targets, coeff):
    """Pure-JAX reference (mirrors the PyTorch module)."""
    n = targets.shape[0]
    logits = pred_logits.astype(jnp.float32)
    lse = jax.nn.logsumexp(logits, axis=-1)
    tgt_logit = jnp.take_along_axis(logits, targets[:, None], axis=-1)[:, 0]
    ce = jnp.mean(lse - tgt_logit)
    knn = knn_logits.astype(jnp.float32)
    p = knn / jnp.sum(knn, -1, keepdims=True)
    logp = jnp.maximum(jnp.log(p), -100.0)
    knn_nll = jnp.mean(-jnp.take_along_axis(logp, targets[:, None], axis=-1)[:, 0])
    loss = ce + ce * knn_nll * coeff
    return loss / n


if __name__ == "__main__":
    key = jax.random.PRNGKey(0)
    ks = jax.random.split(key, 9)

    # --- Test 1: small, single tile -----------------------------------------
    N, C = 8, 32
    pred = jax.random.normal(ks[0], (N, C), dtype=jnp.float32)
    knn = jax.random.uniform(ks[1], (N, C), dtype=jnp.float32) + 0.1
    tgt = jax.random.randint(ks[2], (N,), 0, C, dtype=jnp.int32)
    coeff = 0.5
    out = knn_loss(pred, knn, tgt, coeff)
    jax.block_until_ready(out)
    ref = _knn_loss_ref(pred, knn, tgt, coeff)
    assert jnp.allclose(out, ref, rtol=1e-5, atol=1e-5), (out, ref)

    # --- Test 2: tiled + ragged last tile (grid=(3,), last tile 4 rows) -----
    N2, C2 = 20, 128
    pred2 = jax.random.normal(ks[3], (N2, C2), dtype=jnp.float32)
    knn2 = jax.random.uniform(ks[4], (N2, C2), dtype=jnp.float32) + 0.1
    tgt2 = jax.random.randint(ks[5], (N2,), 0, C2, dtype=jnp.int32)
    out2 = knn_loss(pred2, knn2, tgt2, 0.25, max_tile_rows=8)
    jax.block_until_ready(out2)
    ref2 = _knn_loss_ref(pred2, knn2, tgt2, 0.25)
    assert jnp.allclose(out2, ref2, rtol=1e-5, atol=1e-5), (out2, ref2)

    # --- Test 3: bf16 inputs (native-dtype kNN path, f32 accumulation) ------
    N3, C3 = 16, 64
    pred3 = jax.random.normal(ks[6], (N3, C3), dtype=jnp.float32).astype(jnp.bfloat16)
    knn3 = (jax.random.uniform(ks[7], (N3, C3), dtype=jnp.float32) + 0.1).astype(jnp.bfloat16)
    tgt3 = jax.random.randint(ks[8], (N3,), 0, C3, dtype=jnp.int32)
    out3 = knn_loss(pred3, knn3, tgt3, 0.5)
    jax.block_until_ready(out3)
    ref3 = _knn_loss_ref(pred3, knn3, tgt3, 0.5)
    assert jnp.allclose(out3, ref3, rtol=2e-3, atol=2e-3), (out3, ref3)

    print("KERNEL_OK")
</pallas_src>

<mosaic_0001>
module attributes {stable_mosaic.version = 11 : i64} {
  func.func @_knn_loss_partial_kernel(%arg0: i32, %arg1: memref<8x32xf32, #tpu.memory_space<vmem>>, %arg2: memref<8x32xf32, #tpu.memory_space<vmem>>, %arg3: memref<8x1xi32, #tpu.memory_space<vmem>>, %arg4: memref<1x8x128xf32, #tpu.memory_space<vmem>>, %arg5: memref<1x8x128xf32, #tpu.memory_space<vmem>>) attributes {dimension_semantics = [#tpu.dimension_semantics<parallel>], iteration_bounds = array<i64: 1>, scalar_prefetch = 0 : i64, scratch_operands = 0 : i64, tpu.core_type = #tpu.core_type<tc>, window_params = [{transform_indices = @transform_0, window_bounds = array<i64: 8, 32>}, {transform_indices = @transform_1, window_bounds = array<i64: 8, 32>}, {transform_indices = @transform_2, window_bounds = array<i64: 8, 1>}, {transform_indices = @transform_3, window_bounds = array<i64: 1, 8, 128>}, {transform_indices = @transform_4, window_bounds = array<i64: 1, 8, 128>}]} {
    %c0 = arith.constant 0 : index
    %c0_0 = arith.constant 0 : index
    %0 = vector.load %arg3[%c0, %c0_0] : memref<8x1xi32, #tpu.memory_space<vmem>>, vector<8x1xi32>
    %1 = tpu.iota {dimensions = array<i32: 0>} : vector<8x1xi32>
    %c8_i32 = arith.constant 8 : i32
    %2 = arith.muli %arg0, %c8_i32 : i32
    %3 = vector.broadcast %2 : i32 to vector<8x1xi32>
    %4 = arith.addi %1, %3 : vector<8x1xi32>
    %c8_i32_1 = arith.constant 8 : i32
    %5 = vector.broadcast %c8_i32_1 : i32 to vector<8x1xi32>
    %6 = arith.cmpi slt, %4, %5 : vector<8x1xi32>
    %7 = tpu.iota {dimensions = array<i32: 1>} : vector<1x32xi32>
    %8 = vector.broadcast %7 : vector<1x32xi32> to vector<8x32xi32>
    %9 = vector.broadcast %0 : vector<8x1xi32> to vector<8x32xi32>
    %10 = arith.cmpi eq, %8, %9 : vector<8x32xi32>
    %c0_2 = arith.constant 0 : index
    %c0_3 = arith.constant 0 : index
    %11 = vector.load %arg1[%c0_2, %c0_3] : memref<8x32xf32, #tpu.memory_space<vmem>>, vector<8x32xf32>
    %cst = arith.constant dense<0xFF800000> : vector<8xf32>
    %12 = vector.multi_reduction <maximumf>, %11, %cst [1] : vector<8x32xf32> to vector<8xf32>
    %13 = vector.shape_cast %12 : vector<8xf32> to vector<8x1xf32>
    %14 = vector.broadcast %13 : vector<8x1xf32> to vector<8x32xf32>
    %15 = arith.subf %11, %14 : vector<8x32xf32>
    %16 = math.exp %15 : vector<8x32xf32>
    %cst_4 = arith.constant dense<0.000000e+00> : vector<8xf32>
    %17 = vector.multi_reduction <add>, %16, %cst_4 [1] : vector<8x32xf32> to vector<8xf32>
    %18 = vector.shape_cast %17 : vector<8xf32> to vector<8x1xf32>
    %19 = math.log %18 : vector<8x1xf32>
    %20 = arith.addf %19, %13 : vector<8x1xf32>
    %cst_5 = arith.constant 0.000000e+00 : f32
    %21 = vector.broadcast %cst_5 : f32 to vector<8x32xf32>
    %22 = arith.select %10, %11, %21 : vector<8x32xi1>, vector<8x32xf32>
    %cst_6 = arith.constant dense<0.000000e+00> : vector<8xf32>
    %23 = vector.multi_reduction <add>, %22, %cst_6 [1] : vector<8x32xf32> to vector<8xf32>
    %24 = vector.shape_cast %23 : vector<8xf32> to vector<8x1xf32>
    %25 = arith.subf %20, %24 : vector<8x1xf32>
    %cst_7 = arith.constant 0.000000e+00 : f32
    %26 = vector.broadcast %cst_7 : f32 to vector<8x1xf32>
    %27 = arith.select %6, %25, %26 : vector<8x1xi1>, vector<8x1xf32>
    %cst_8 = arith.constant dense<0.000000e+00> : vector<1xf32>
    %28 = vector.multi_reduction <add>, %27, %cst_8 [0] : vector<8x1xf32> to vector<1xf32>
    %29 = vector.shape_cast %28 : vector<1xf32> to vector<1x1xf32>
    %c0_9 = arith.constant 0 : index
    %c0_10 = arith.constant 0 : index
    %30 = vector.load %arg2[%c0_9, %c0_10] : memref<8x32xf32, #tpu.memory_space<vmem>>, vector<8x32xf32>
    %cst_11 = arith.constant dense<0.000000e+00> : vector<8xf32>
    %31 = vector.multi_reduction <add>, %30, %cst_11 [1] : vector<8x32xf32> to vector<8xf32>
    %32 = vector.shape_cast %31 : vector<8xf32> to vector<8x1xf32>
    %cst_12 = arith.constant 0.000000e+00 : f32
    %33 = vector.broadcast %cst_12 : f32 to vector<8x32xf32>
    %34 = arith.select %10, %30, %33 : vector<8x32xi1>, vector<8x32xf32>
    %cst_13 = arith.constant dense<0.000000e+00> : vector<8xf32>
    %35 = vector.multi_reduction <add>, %34, %cst_13 [1] : vector<8x32xf32> to vector<8xf32>
    %36 = vector.shape_cast %35 : vector<8xf32> to vector<8x1xf32>
    %37 = arith.divf %36, %32 : vector<8x1xf32>
    %38 = math.log %37 : vector<8x1xf32>
    %cst_14 = arith.constant -1.000000e+02 : f32
    %39 = vector.broadcast %cst_14 : f32 to vector<8x1xf32>
    %40 = arith.maximumf %38, %39 : vector<8x1xf32>
    %cst_15 = arith.constant 0.000000e+00 : f32
    %41 = vector.broadcast %cst_15 : f32 to vector<8x1xf32>
    %42 = arith.subf %41, %40 : vector<8x1xf32>
    %cst_16 = arith.constant 0.000000e+00 : f32
    %43 = vector.broadcast %cst_16 : f32 to vector<8x1xf32>
    %44 = arith.select %6, %42, %43 : vector<8x1xi1>, vector<8x1xf32>
    %cst_17 = arith.constant dense<0.000000e+00> : vector<1xf32>
    %45 = vector.multi_reduction <add>, %44, %cst_17 [0] : vector<8x1xf32> to vector<1xf32>
    %46 = vector.shape_cast %45 : vector<1xf32> to vector<1x1xf32>
    %47 = vector.shape_cast %29 : vector<1x1xf32> to vector<1x1xf32>
    %48 = vector.broadcast %47 : vector<1x1xf32> to vector<8x128xf32>
    %c0_18 = arith.constant 0 : index
    %c0_19 = arith.constant 0 : index
    %c0_20 = arith.constant 0 : index
    %49 = vector.load %arg4[%c0_18, %c0_19, %c0_20] : memref<1x8x128xf32, #tpu.memory_space<vmem>>, vector<1x8x128xf32>
    %50 = vector.shape_cast %49 : vector<1x8x128xf32> to vector<8x128xf32>
    %51 = vector.shape_cast %48 : vector<8x128xf32> to vector<1x8x128xf32>
    tpu.vector_store %arg4[%c0_18, %c0_19, %c0_20], %51 {strides = array<i32>} : memref<1x8x128xf32, #tpu.memory_space<vmem>>, vector<1x8x128xf32>,
    %52 = vector.shape_cast %46 : vector<1x1xf32> to vector<1x1xf32>
    %53 = vector.broadcast %52 : vector<1x1xf32> to vector<8x128xf32>
    %c0_21 = arith.constant 0 : index
    %c0_22 = arith.constant 0 : index
    %c0_23 = arith.constant 0 : index
    %54 = vector.load %arg5[%c0_21, %c0_22, %c0_23] : memref<1x8x128xf32, #tpu.memory_space<vmem>>, vector<1x8x128xf32>
    %55 = vector.shape_cast %54 : vector<1x8x128xf32> to vector<8x128xf32>
    %56 = vector.shape_cast %53 : vector<8x128xf32> to vector<1x8x128xf32>
    tpu.vector_store %arg5[%c0_21, %c0_22, %c0_23], %56 {strides = array<i32>} : memref<1x8x128xf32, #tpu.memory_space<vmem>>, vector<1x8x128xf32>,
    return
  }
  func.func @transform_0(%arg0: i32) -> (i32, i32) {
    %c0_i32 = arith.constant 0 : i32
    %c0_i32_0 = arith.constant 0 : i32
    return %arg0, %c0_i32 : i32, i32
  }
  func.func @transform_1(%arg0: i32) -> (i32, i32) {
    %c0_i32 = arith.constant 0 : i32
    %c0_i32_0 = arith.constant 0 : i32
    return %arg0, %c0_i32 : i32, i32
  }
  func.func @transform_2(%arg0: i32) -> (i32, i32) {
    %c0_i32 = arith.constant 0 : i32
    %c0_i32_0 = arith.constant 0 : i32
    return %arg0, %c0_i32 : i32, i32
  }
  func.func @transform_3(%arg0: i32) -> (i32, i32, i32) {
    %c0_i32 = arith.constant 0 : i32
    %c0_i32_0 = arith.constant 0 : i32
    %c0_i32_1 = arith.constant 0 : i32
    return %arg0, %c0_i32, %c0_i32_0 : i32, i32, i32
  }
  func.func @transform_4(%arg0: i32) -> (i32, i32, i32) {
    %c0_i32 = arith.constant 0 : i32
    %c0_i32_0 = arith.constant 0 : i32
    %c0_i32_1 = arith.constant 0 : i32
    return %arg0, %c0_i32, %c0_i32_0 : i32, i32, i32
  }
}

</mosaic_0001>

<llo_original>
// kernel: tpu_custom_call.1
$region0: #{tpu_custom_call.1}
  #allocation0 [shape = 'u32[]', space=smem, size = 0x4, offset = 0x4, fixed_abs, tag = 'smem constant byte address 0x4 - core index']
  #allocation1 [shape = 'u32[144,128]{1,0:T(1,128)}', space=vmem, size = 0x12000, scoped, tag = 'internal scratch']
  %s0 = inlined_call_operand.vmem [shape: f32[8,32], index: 0, kind: input, shape index: {}]
  %s1 = inlined_call_operand.hbm [shape: f32[8,32], index: 1, kind: input, shape index: {}]
  %s2 = inlined_call_operand.vmem [shape: s32[8,1], index: 2, kind: input, shape index: {}]
  %s3 = inlined_call_operand.hbm [shape: f32[1,8,128], index: 3, kind: output, shape index: {0}]
  %s4 = inlined_call_operand.hbm [shape: f32[1,8,128], index: 4, kind: output, shape index: {1}]
  %5 = xla_tuple %s3, %s4
  %s6 = sld [smem:[#allocation0]]
  $region34: #{tpu_custom_call.1} parent=0
    _
  %s8 = ssub.s32 1, %s6
  %s9 = scalar_select 0, %s8, %s6
  $region1: #{tpu_custom_call.1} parent=0
    #allocation2 [shape = 'u8[4096]{0}', space=vmem, size = 0x1000, scoped, tag = 'input window, operand 1, single buffered']
    #allocation3 [shape = 's32[1]{0}', space=sflag, size = 0x4, scoped, tag = 'scoped memory for tpu_custom_call.1']
    #allocation4 [shape = 's32[1]{0}', space=sflag, size = 0x4, scoped, tag = 'scoped memory for tpu_custom_call.1']
    #allocation5 [shape = 'u8[4096]{0}', space=vmem, size = 0x1000, scoped, tag = 'output window, operand 0, single buffered']
    #allocation6 [shape = 'u8[4096]{0}', space=vmem, size = 0x1000, scoped, tag = 'output window, operand 1, single buffered']
    #allocation7 [shape = 's32[1]{0}', space=sflag, size = 0x4, scoped, tag = 'scoped memory for tpu_custom_call.1']
    %10 = vsyncpa [#allocation3], 0
    %11 = vsyncpa [#allocation4], 0
    %12 = vsyncpa [#allocation7], 0
    // Predicated region
    $region2: #{tpu_custom_call.1} parent=1 // pred_check
      _
    $region3: #{tpu_custom_call.1} parent=1 // pred_check_branch
      %14 = sbr.rel (0) target = $region5
    $region4: #{tpu_custom_call.1} parent=1 // pred_region
      _
    $region5: #{tpu_custom_call.1} parent=1 // pred_fallthru
      _
    // Predicated region
    $region6: #{tpu_custom_call.1} parent=1 // pred_check
      _
    $region7: #{tpu_custom_call.1} parent=1 // pred_check_branch
      %16 = sbr.rel (0) target = $region9
    $region8: #{tpu_custom_call.1} parent=1 // pred_region
      %s18 = ssub.s32 128, 128
      %19 = vsyncadd [#allocation3], %s18
      %s21 = sshll.u32 [#allocation2], 4
      %s22 = int_to_ptr.vmem [resolvable:$true] %s21
      %24 = dma.hbm_to_vmem [thread:$0]  %s1, 128, %s22, [#allocation3]
    $region9: #{tpu_custom_call.1} parent=1 // pred_fallthru
      _
    // Predicated region
    $region10: #{tpu_custom_call.1} parent=1 // pred_check
      _
    $region11: #{tpu_custom_call.1} parent=1 // pred_check_branch
      %26 = sbr.rel (0) target = $region13
    $region12: #{tpu_custom_call.1} parent=1 // pred_region
      _
    $region13: #{tpu_custom_call.1} parent=1 // pred_fallthru
      _
    // Predicated region
    $region14: #{tpu_custom_call.1} parent=1 // pred_check
      _
    $region15: #{tpu_custom_call.1} parent=1 // pred_check_branch
      %28 = sbr.rel (0) target = $region17
    $region16: #{tpu_custom_call.1} parent=1 // pred_region
      %29 = dma.done [#allocation3], 128
    $region17: #{tpu_custom_call.1} parent=1 // pred_fallthru
      _
    %v30 = vld [vmem:[%s2] sm:$0xff]
    %v31 = vlaneseq
    %v32 = vshrl.u32 %v31, 7
    %s33 = smul.u32 0, 8
    %v34 = vstv %s33
    %v35 = vadd.s32 %v32, %v34
    %vm36 = vcmp.lt.s32.totalorder %v35, 8
    %v37 = vlaneseq
    %v38 = vand.u32 %v37, 127
    %39 = vset.pattern.permute.xlu0 0
    %40 = vperm.xlu0 %39, %v30
    %v41 = vpop.permute.xlu0 %40
    %vm42 = vcmp.eq.s32.totalorder %v38, %v41
    %v43 = vld [vmem:[%s0] sm:$0xff]
    %vm44 = vcmask 261120
    %v45 = vsel %vm44, %v43, -inf
    %46 = vmax.xlane.f32.xlu0 %v45
    %v47 = vpop.xlane.xlu0 %46
    %v48 = vsub.f32 %v43, %v47
    %v49 = vmul.f32 %v48, 1.442695
    %v50 = vpow.pop %v49
    %v51 = vsel %vm44, %v50, 0.0
    %52 = vadd.xlane.f32.xlu0 %v51
    %v53 = vpop.xlane.xlu0 %52
    %v54 = vlog2.pop %v53
    %v55 = vmul.f32 %v54, 0.6931472
    %v56 = vadd.f32 %v55, %v47
    %v57 = vsel %vm42, %v43, 0.0
    %v58 = vsel %vm44, %v57, 0.0
    %59 = vadd.xlane.f32.xlu0 %v58
    %v60 = vpop.xlane.xlu0 %59
    %v61 = vsub.f32 %v56, %v60
    %v62 = vsel %vm36, %v61, 0.0
    %v63 = vrot.slane %v62, 4
    %v64 = vadd.f32 %v62, %v63
    %v65 = vrot.slane %v64, 2
    %v66 = vadd.f32 %v64, %v65
    %v67 = vrot.slane %v66, 1
    %v68 = vadd.f32 %v66, %v67
    %v69 = vld [vmem:[#allocation2] sm:$0xff]
    %v70 = vsel %vm44, %v69, 0.0
    %71 = vadd.xlane.f32.xlu0 %v70
    %v72 = vpop.xlane.xlu0 %71
    %v73 = vsel %vm42, %v69, 0.0
    %v74 = vsel %vm44, %v73, 0.0
    %75 = vadd.xlane.f32.xlu0 %v74
    %v76 = vpop.xlane.xlu0 %75
    %v77 = vrcp.pop %v72
    %v78 = vmul.f32 %v76, %v77
    %v79 = vlog2.pop %v78
    %v80 = vmul.f32 %v79, 0.6931472
    %v81 = vmax.f32 %v80, -100.0
    %v82 = vsub.f32 0.0, %v81
    %v83 = vsel %vm36, %v82, 0.0
    %v84 = vrot.slane %v83, 4
    %v85 = vadd.f32 %v83, %v84
    %v86 = vrot.slane %v85, 2
    %v87 = vadd.f32 %v85, %v86
    %v88 = vrot.slane %v87, 1
    %v89 = vadd.f32 %v87, %v88
    %90 = vst [vmem:[#allocation5] sm:$0xff] %v68
    %91 = vst [vmem:[#allocation6] sm:$0xff] %v89
    // Predicated region
    $region18: #{tpu_custom_call.1} parent=1 // pred_check
      _
    $region19: #{tpu_custom_call.1} parent=1 // pred_check_branch
      %93 = sbr.rel (0) target = $region21
    $region20: #{tpu_custom_call.1} parent=1 // pred_region
      %s95 = ssub.s32 128, 128
      %96 = vsyncadd [#allocation4], %s95
      %s98 = sshll.u32 [#allocation5], 4
      %s99 = int_to_ptr.vmem [resolvable:$true] %s98
      %101 = dma.vmem_to_hbm [thread:$0]  %s99, 128, %s3, [#allocation4]
    $region21: #{tpu_custom_call.1} parent=1 // pred_fallthru
      _
    // Predicated region
    $region22: #{tpu_custom_call.1} parent=1 // pred_check
      _
    $region23: #{tpu_custom_call.1} parent=1 // pred_check_branch
      %103 = sbr.rel (0) target = $region25
    $region24: #{tpu_custom_call.1} parent=1 // pred_region
      %s105 = ssub.s32 128, 128
      %106 = vsyncadd [#allocation7], %s105
      %s108 = sshll.u32 [#allocation6], 4
      %s109 = int_to_ptr.vmem [resolvable:$true] %s108
      %111 = dma.vmem_to_hbm [thread:$0]  %s109, 128, %s4, [#allocation7]
    $region25: #{tpu_custom_call.1} parent=1 // pred_fallthru
      _
    // Predicated region
    $region26: #{tpu_custom_call.1} parent=1 // pred_check
      _
    $region27: #{tpu_custom_call.1} parent=1 // pred_check_branch
      %113 = sbr.rel (0) target = $region29
    $region28: #{tpu_custom_call.1} parent=1 // pred_region
      %114 = dma.done [#allocation4], 128
    $region29: #{tpu_custom_call.1} parent=1 // pred_fallthru
      _
    // Predicated region
    $region30: #{tpu_custom_call.1} parent=1 // pred_check
      _
    $region31: #{tpu_custom_call.1} parent=1 // pred_check_branch
      %116 = sbr.rel (0) target = $region33
    $region32: #{tpu_custom_call.1} parent=1 // pred_region
      %117 = dma.done [#allocation7], 128
    $region33: #{tpu_custom_call.1} parent=1 // pred_fallthru
      _
    %118 = vsyncpa [#allocation3], 1
    %119 = vsyncpa [#allocation4], 1
    %120 = vsyncpa [#allocation7], 1

</llo_original>
